<compile_context>
chip_gen: v7x
topology: tpu7x:2x2x1
jax: 0.10.0
libtpu: 0.0.40
codegen_flags: <defaults>
</compile_context>

<pallas_src>
import jax
import jax.numpy as jnp
from jax.experimental import pallas as pl
from jax.experimental.pallas import tpu as pltpu

D_IN, H1, H2, H3, D_OUT = 384, 128, 128, 64, 1
ALPHA = 0.1
INV_ALPHA = 1.0 / ALPHA


def _celu(x):
    # torch: where(x > 0, x, alpha * (exp(x / alpha) - 1)); divide replaced
    # by a multiply so the VALU only sees one mul and the EUP carries the exp.
    return jnp.where(x > 0, x, ALPHA * (jnp.exp(x * INV_ALPHA) - 1.0))


def atomic_network_kernel(aev_ref,
                          w1_ref, b1_ref,
                          w2_ref, b2_ref,
                          w3_ref, b3_ref,
                          w4_ref, b4_ref,
                          out_ref):
    # aev_ref / w1..w3 are already in the matmul dtype (bf16 or f32) from the
    # wrapper; biases, CELU and the last layer stay f32 (f32 accumulation).
    x = aev_ref[...]

    y = jnp.dot(x, w1_ref[...], preferred_element_type=jnp.float32) + b1_ref[...]
    y = _celu(y)

    y = jnp.dot(y.astype(w2_ref.dtype), w2_ref[...],
                preferred_element_type=jnp.float32) + b2_ref[...]
    y = _celu(y)

    y = jnp.dot(y.astype(w3_ref.dtype), w3_ref[...],
                preferred_element_type=jnp.float32) + b3_ref[...]
    y = _celu(y)

    # Layer 4 (64 -> 1): VPU broadcast-multiply + lane reduction; w4 is a
    # (1, 64) row so sum(y * w4, -1) + b4 == y @ W4.T + b4 (nn.Linear(64, 1)).
    y = jnp.sum(y * w4_ref[...], axis=-1, keepdims=True) + b4_ref[...]

    out_ref[...] = y.astype(out_ref.dtype)


def _round_up(x, m):
    return ((x + m - 1) // m) * m


def atomic_network_forward(aev, params, *, tile_n=1024, use_bf16=True):
    """aev: (N, 384). Returns (N, 1) float32.

    params = (w1, b1, w2, b2, w3, b3, w4_row, b4); weights stored
    (in_features, out_features), w4 stored as a (1, 64) row, biases (1, out).
    """
    N, d = aev.shape
    assert d == D_IN
    w1, b1, w2, b2, w3, b3, w4, b4 = params

    mm_dtype = jnp.bfloat16 if use_bf16 else jnp.float32
    aev_mm = aev.astype(mm_dtype)
    w1, w2, w3 = (w.astype(mm_dtype) for w in (w1, w2, w3))
    b1, b2, b3 = (b.astype(jnp.float32) for b in (b1, b2, b3))
    w4 = w4.astype(jnp.float32)
    b4 = b4.astype(jnp.float32)

    # Ragged N: shrink the tile for tiny inputs, pad rows to a tile multiple.
    tile_n = max(8, min(tile_n, _round_up(N, 8)))
    tile_n = _round_up(tile_n, 8)
    n_pad = _round_up(N, tile_n)
    if n_pad != N:
        aev_mm = jnp.pad(aev_mm, ((0, n_pad - N), (0, 0)))

    grid = (n_pad // tile_n,)

    def act_map(i):
        return (i, 0)

    def rep_map(i):
        # Constant block index: weights/biases stay resident across the grid
        # (the pipeline re-uses the same VMEM block, no per-step re-DMA).
        return (0, 0)

    in_specs = [
        pl.BlockSpec((tile_n, D_IN), act_map),
        pl.BlockSpec((D_IN, H1), rep_map), pl.BlockSpec((1, H1), rep_map),
        pl.BlockSpec((H1, H2), rep_map),   pl.BlockSpec((1, H2), rep_map),
        pl.BlockSpec((H2, H3), rep_map),   pl.BlockSpec((1, H3), rep_map),
        pl.BlockSpec((1, H3), rep_map),    pl.BlockSpec((1, D_OUT), rep_map),
    ]
    out_specs = pl.BlockSpec((tile_n, D_OUT), act_map)

    out = pl.pallas_call(
        atomic_network_kernel,
        out_shape=jax.ShapeDtypeStruct((n_pad, D_OUT), jnp.float32),
        grid=grid,
        in_specs=in_specs,
        out_specs=out_specs,
        compiler_params=pltpu.CompilerParams(
            dimension_semantics=("parallel",)),
    )(aev_mm, w1, b1, w2, b2, w3, b3, w4, b4)

    return out[:N]


def init_params(key):
    """Deterministic init mimicking torch.nn.Linear default:
    uniform(-1/sqrt(fan_in), 1/sqrt(fan_in)). Weights stored (in, out),
    except w4 which is stored as a (1, 64) row (out, in)."""
    dims = [(D_IN, H1), (H1, H2), (H2, H3), (H3, D_OUT)]
    params = []
    for li, (fi, fo) in enumerate(dims):
        key, kw, kb = jax.random.split(key, 3)
        bound = 1.0 / jnp.sqrt(jnp.float32(fi))
        wshape = (1, fi) if li == 3 else (fi, fo)      # last layer: (1, 64) row
        w = jax.random.uniform(kw, wshape, jnp.float32, -bound, bound)
        b = jax.random.uniform(kb, (1, fo), jnp.float32, -bound, bound)
        params += [w, b]
    return tuple(params)


def reference_forward(aev, params):
    """Pure f32 reference matching the torch module."""
    w1, b1, w2, b2, w3, b3, w4, b4 = params
    y = _celu(aev @ w1 + b1)
    y = _celu(y @ w2 + b2)
    y = _celu(y @ w3 + b3)
    return y @ w4.T + b4


def reference_forward_mm(aev, params, mm_dtype):
    """Reference emulating the kernel's mixed precision (matmul operands in
    mm_dtype, f32 accumulation, f32 CELU, f32 last layer)."""
    w1, b1, w2, b2, w3, b3, w4, b4 = params
    q = lambda a: a.astype(mm_dtype).astype(jnp.float32)
    y = _celu(q(aev) @ q(w1) + b1)
    y = _celu(q(y) @ q(w2) + b2)
    y = _celu(q(y) @ q(w3) + b3)
    return y @ w4.T + b4


if __name__ == "__main__":
    key = jax.random.PRNGKey(0)
    kp, kx1, kx2 = jax.random.split(key, 3)
    params = init_params(kp)

    # Test 1: small batch, pure f32 path, single grid step.
    N1 = 16
    aev1 = jax.random.normal(kx1, (N1, D_IN), jnp.float32)
    out1 = jax.block_until_ready(
        atomic_network_forward(aev1, params, use_bf16=False))
    ref1 = reference_forward(aev1, params)
    assert out1.shape == (N1, 1)
    assert jnp.allclose(out1, ref1, atol=1e-4, rtol=1e-4), "f32 path mismatch"

    # Test 2: ragged batch, bf16 fast path, multi-step grid with tail padding.
    N2 = 200
    aev2 = jax.random.normal(kx2, (N2, D_IN), jnp.float32)
    out2 = jax.block_until_ready(
        atomic_network_forward(aev2, params, tile_n=128, use_bf16=True))
    ref2_mm = reference_forward_mm(aev2, params, jnp.bfloat16)
    ref2_f32 = reference_forward(aev2, params)
    assert out2.shape == (N2, 1)
    assert jnp.allclose(out2, ref2_mm, atol=2e-3, rtol=2e-3), "bf16 path mismatch"
    assert jnp.allclose(out2, ref2_f32, atol=5e-2, rtol=5e-2), "bf16 vs f32 drift"

    print("KERNEL_OK")
</pallas_src>

<mosaic_0001>
module attributes {stable_mosaic.version = 11 : i64} {
  func.func @atomic_network_kernel(%arg0: i32, %arg1: memref<16x384xf32, #tpu.memory_space<vmem>>, %arg2: memref<384x128xf32, #tpu.memory_space<vmem>>, %arg3: memref<1x128xf32, #tpu.memory_space<vmem>>, %arg4: memref<128x128xf32, #tpu.memory_space<vmem>>, %arg5: memref<1x128xf32, #tpu.memory_space<vmem>>, %arg6: memref<128x64xf32, #tpu.memory_space<vmem>>, %arg7: memref<1x64xf32, #tpu.memory_space<vmem>>, %arg8: memref<1x64xf32, #tpu.memory_space<vmem>>, %arg9: memref<1x1xf32, #tpu.memory_space<vmem>>, %arg10: memref<16x1xf32, #tpu.memory_space<vmem>>) attributes {dimension_semantics = [#tpu.dimension_semantics<parallel>], iteration_bounds = array<i64: 1>, scalar_prefetch = 0 : i64, scratch_operands = 0 : i64, tpu.core_type = #tpu.core_type<tc>, window_params = [{transform_indices = @transform_0, window_bounds = array<i64: 16, 384>}, {pipeline_mode = #tpu.pipeline_mode<synchronous>, transform_indices = @transform_1, window_bounds = array<i64: 384, 128>}, {pipeline_mode = #tpu.pipeline_mode<synchronous>, transform_indices = @transform_2, window_bounds = array<i64: 1, 128>}, {pipeline_mode = #tpu.pipeline_mode<synchronous>, transform_indices = @transform_3, window_bounds = array<i64: 128, 128>}, {pipeline_mode = #tpu.pipeline_mode<synchronous>, transform_indices = @transform_4, window_bounds = array<i64: 1, 128>}, {pipeline_mode = #tpu.pipeline_mode<synchronous>, transform_indices = @transform_5, window_bounds = array<i64: 128, 64>}, {pipeline_mode = #tpu.pipeline_mode<synchronous>, transform_indices = @transform_6, window_bounds = array<i64: 1, 64>}, {pipeline_mode = #tpu.pipeline_mode<synchronous>, transform_indices = @transform_7, window_bounds = array<i64: 1, 64>}, {pipeline_mode = #tpu.pipeline_mode<synchronous>, transform_indices = @transform_8, window_bounds = array<i64: 1, 1>}, {transform_indices = @transform_9, window_bounds = array<i64: 16, 1>}]} {
    %c0 = arith.constant 0 : index
    %c0_0 = arith.constant 0 : index
    %0 = vector.load %arg1[%c0, %c0_0] : memref<16x384xf32, #tpu.memory_space<vmem>>, vector<16x384xf32>
    %c0_1 = arith.constant 0 : index
    %c0_2 = arith.constant 0 : index
    %1 = vector.load %arg2[%c0_1, %c0_2] : memref<384x128xf32, #tpu.memory_space<vmem>>, vector<384x128xf32>
    %cst = arith.constant dense<0.000000e+00> : vector<16x128xf32>
    %2 = tpu.matmul %0, %1, %cst {dimension_numbers = #tpu.dot_dimension_numbers<[1], [0], [0], [1], [0, 0, 1, 1], [], []>} : vector<16x384xf32>, vector<384x128xf32>, vector<16x128xf32> -> vector<16x128xf32>
    %c0_3 = arith.constant 0 : index
    %c0_4 = arith.constant 0 : index
    %3 = vector.load %arg3[%c0_3, %c0_4] : memref<1x128xf32, #tpu.memory_space<vmem>>, vector<1x128xf32>
    %4 = vector.broadcast %3 : vector<1x128xf32> to vector<16x128xf32>
    %5 = arith.addf %2, %4 : vector<16x128xf32>
    %cst_5 = arith.constant 0.000000e+00 : f32
    %6 = vector.broadcast %cst_5 : f32 to vector<16x128xf32>
    %7 = arith.cmpf ogt, %5, %6 : vector<16x128xf32>
    %cst_6 = arith.constant 1.000000e+01 : f32
    %8 = vector.broadcast %cst_6 : f32 to vector<16x128xf32>
    %9 = arith.mulf %5, %8 : vector<16x128xf32>
    %10 = math.exp %9 : vector<16x128xf32>
    %cst_7 = arith.constant 1.000000e+00 : f32
    %11 = vector.broadcast %cst_7 : f32 to vector<16x128xf32>
    %12 = arith.subf %10, %11 : vector<16x128xf32>
    %cst_8 = arith.constant 1.000000e-01 : f32
    %13 = vector.broadcast %cst_8 : f32 to vector<16x128xf32>
    %14 = arith.mulf %13, %12 : vector<16x128xf32>
    %15 = arith.select %7, %5, %14 : vector<16x128xi1>, vector<16x128xf32>
    %c0_9 = arith.constant 0 : index
    %c0_10 = arith.constant 0 : index
    %16 = vector.load %arg4[%c0_9, %c0_10] : memref<128x128xf32, #tpu.memory_space<vmem>>, vector<128x128xf32>
    %cst_11 = arith.constant dense<0.000000e+00> : vector<16x128xf32>
    %17 = tpu.matmul %15, %16, %cst_11 {dimension_numbers = #tpu.dot_dimension_numbers<[1], [0], [0], [1], [0, 0, 1, 1], [], []>} : vector<16x128xf32>, vector<128x128xf32>, vector<16x128xf32> -> vector<16x128xf32>
    %c0_12 = arith.constant 0 : index
    %c0_13 = arith.constant 0 : index
    %18 = vector.load %arg5[%c0_12, %c0_13] : memref<1x128xf32, #tpu.memory_space<vmem>>, vector<1x128xf32>
    %19 = vector.broadcast %18 : vector<1x128xf32> to vector<16x128xf32>
    %20 = arith.addf %17, %19 : vector<16x128xf32>
    %cst_14 = arith.constant 0.000000e+00 : f32
    %21 = vector.broadcast %cst_14 : f32 to vector<16x128xf32>
    %22 = arith.cmpf ogt, %20, %21 : vector<16x128xf32>
    %cst_15 = arith.constant 1.000000e+01 : f32
    %23 = vector.broadcast %cst_15 : f32 to vector<16x128xf32>
    %24 = arith.mulf %20, %23 : vector<16x128xf32>
    %25 = math.exp %24 : vector<16x128xf32>
    %cst_16 = arith.constant 1.000000e+00 : f32
    %26 = vector.broadcast %cst_16 : f32 to vector<16x128xf32>
    %27 = arith.subf %25, %26 : vector<16x128xf32>
    %cst_17 = arith.constant 1.000000e-01 : f32
    %28 = vector.broadcast %cst_17 : f32 to vector<16x128xf32>
    %29 = arith.mulf %28, %27 : vector<16x128xf32>
    %30 = arith.select %22, %20, %29 : vector<16x128xi1>, vector<16x128xf32>
    %c0_18 = arith.constant 0 : index
    %c0_19 = arith.constant 0 : index
    %31 = vector.load %arg6[%c0_18, %c0_19] : memref<128x64xf32, #tpu.memory_space<vmem>>, vector<128x64xf32>
    %cst_20 = arith.constant dense<0.000000e+00> : vector<16x64xf32>
    %32 = tpu.matmul %30, %31, %cst_20 {dimension_numbers = #tpu.dot_dimension_numbers<[1], [0], [0], [1], [0, 0, 1, 1], [], []>} : vector<16x128xf32>, vector<128x64xf32>, vector<16x64xf32> -> vector<16x64xf32>
    %c0_21 = arith.constant 0 : index
    %c0_22 = arith.constant 0 : index
    %33 = vector.load %arg7[%c0_21, %c0_22] : memref<1x64xf32, #tpu.memory_space<vmem>>, vector<1x64xf32>
    %34 = vector.broadcast %33 : vector<1x64xf32> to vector<16x64xf32>
    %35 = arith.addf %32, %34 : vector<16x64xf32>
    %cst_23 = arith.constant 0.000000e+00 : f32
    %36 = vector.broadcast %cst_23 : f32 to vector<16x64xf32>
    %37 = arith.cmpf ogt, %35, %36 : vector<16x64xf32>
    %cst_24 = arith.constant 1.000000e+01 : f32
    %38 = vector.broadcast %cst_24 : f32 to vector<16x64xf32>
    %39 = arith.mulf %35, %38 : vector<16x64xf32>
    %40 = math.exp %39 : vector<16x64xf32>
    %cst_25 = arith.constant 1.000000e+00 : f32
    %41 = vector.broadcast %cst_25 : f32 to vector<16x64xf32>
    %42 = arith.subf %40, %41 : vector<16x64xf32>
    %cst_26 = arith.constant 1.000000e-01 : f32
    %43 = vector.broadcast %cst_26 : f32 to vector<16x64xf32>
    %44 = arith.mulf %43, %42 : vector<16x64xf32>
    %45 = arith.select %37, %35, %44 : vector<16x64xi1>, vector<16x64xf32>
    %c0_27 = arith.constant 0 : index
    %c0_28 = arith.constant 0 : index
    %46 = vector.load %arg8[%c0_27, %c0_28] : memref<1x64xf32, #tpu.memory_space<vmem>>, vector<1x64xf32>
    %47 = vector.broadcast %46 : vector<1x64xf32> to vector<16x64xf32>
    %48 = arith.mulf %45, %47 : vector<16x64xf32>
    %cst_29 = arith.constant dense<0.000000e+00> : vector<16xf32>
    %49 = vector.multi_reduction <add>, %48, %cst_29 [1] : vector<16x64xf32> to vector<16xf32>
    %50 = vector.shape_cast %49 : vector<16xf32> to vector<16x1xf32>
    %c0_30 = arith.constant 0 : index
    %c0_31 = arith.constant 0 : index
    %51 = vector.load %arg9[%c0_30, %c0_31] : memref<1x1xf32, #tpu.memory_space<vmem>>, vector<1x1xf32>
    %52 = vector.broadcast %51 : vector<1x1xf32> to vector<16x1xf32>
    %53 = arith.addf %50, %52 : vector<16x1xf32>
    %c0_32 = arith.constant 0 : index
    %c0_33 = arith.constant 0 : index
    %54 = vector.load %arg10[%c0_32, %c0_33] : memref<16x1xf32, #tpu.memory_space<vmem>>, vector<16x1xf32>
    tpu.vector_store %arg10[%c0_32, %c0_33], %53 {strides = array<i32>} : memref<16x1xf32, #tpu.memory_space<vmem>>, vector<16x1xf32>,
    return
  }
  func.func @transform_0(%arg0: i32) -> (i32, i32) {
    %c0_i32 = arith.constant 0 : i32
    %c0_i32_0 = arith.constant 0 : i32
    return %arg0, %c0_i32 : i32, i32
  }
  func.func @transform_1(%arg0: i32) -> (i32, i32) {
    %c0_i32 = arith.constant 0 : i32
    %c0_i32_0 = arith.constant 0 : i32
    %c0_i32_1 = arith.constant 0 : i32
    return %c0_i32, %c0_i32_0 : i32, i32
  }
  func.func @transform_2(%arg0: i32) -> (i32, i32) {
    %c0_i32 = arith.constant 0 : i32
    %c0_i32_0 = arith.constant 0 : i32
    %c0_i32_1 = arith.constant 0 : i32
    return %c0_i32, %c0_i32_0 : i32, i32
  }
  func.func @transform_3(%arg0: i32) -> (i32, i32) {
    %c0_i32 = arith.constant 0 : i32
    %c0_i32_0 = arith.constant 0 : i32
    %c0_i32_1 = arith.constant 0 : i32
    return %c0_i32, %c0_i32_0 : i32, i32
  }
  func.func @transform_4(%arg0: i32) -> (i32, i32) {
    %c0_i32 = arith.constant 0 : i32
    %c0_i32_0 = arith.constant 0 : i32
    %c0_i32_1 = arith.constant 0 : i32
    return %c0_i32, %c0_i32_0 : i32, i32
  }
  func.func @transform_5(%arg0: i32) -> (i32, i32) {
    %c0_i32 = arith.constant 0 : i32
    %c0_i32_0 = arith.constant 0 : i32
    %c0_i32_1 = arith.constant 0 : i32
    return %c0_i32, %c0_i32_0 : i32, i32
  }
  func.func @transform_6(%arg0: i32) -> (i32, i32) {
    %c0_i32 = arith.constant 0 : i32
    %c0_i32_0 = arith.constant 0 : i32
    %c0_i32_1 = arith.constant 0 : i32
    return %c0_i32, %c0_i32_0 : i32, i32
  }
  func.func @transform_7(%arg0: i32) -> (i32, i32) {
    %c0_i32 = arith.constant 0 : i32
    %c0_i32_0 = arith.constant 0 : i32
    %c0_i32_1 = arith.constant 0 : i32
    return %c0_i32, %c0_i32_0 : i32, i32
  }
  func.func @transform_8(%arg0: i32) -> (i32, i32) {
    %c0_i32 = arith.constant 0 : i32
    %c0_i32_0 = arith.constant 0 : i32
    %c0_i32_1 = arith.constant 0 : i32
    return %c0_i32, %c0_i32_0 : i32, i32
  }
  func.func @transform_9(%arg0: i32) -> (i32, i32) {
    %c0_i32 = arith.constant 0 : i32
    %c0_i32_0 = arith.constant 0 : i32
    return %arg0, %c0_i32 : i32, i32
  }
}

</mosaic_0001>

<llo_original>
// kernel: tpu_custom_call.1
$region0: #{tpu_custom_call.1}
  #allocation0 [shape = 'u32[]', space=smem, size = 0x4, offset = 0x4, fixed_abs, tag = 'smem constant byte address 0x4 - core index']
  #allocation1 [shape = 'u32[144,128]{1,0:T(1,128)}', space=vmem, size = 0x12000, scoped, tag = 'internal scratch']
  #allocation2 [shape = 'f32[1,1]{1,0:T(1,128)S(1)}', space=vmem, size = 0x200, scoped, tag = 'scoped memory for tpu_custom_call.1']
  %s0 = inlined_call_operand.vmem [shape: f32[16,384], index: 0, kind: input, shape index: {}]
  %s1 = inlined_call_operand.hbm [shape: f32[384,128], index: 1, kind: input, shape index: {}]
  %s2 = inlined_call_operand.vmem [shape: f32[1,128], index: 2, kind: input, shape index: {}]
  %s3 = inlined_call_operand.vmem [shape: f32[128,128], index: 3, kind: input, shape index: {}]
  %s4 = inlined_call_operand.vmem [shape: f32[1,128], index: 4, kind: input, shape index: {}]
  %s5 = inlined_call_operand.vmem [shape: f32[128,64], index: 5, kind: input, shape index: {}]
  %s6 = inlined_call_operand.vmem [shape: f32[1,64], index: 6, kind: input, shape index: {}]
  %s7 = inlined_call_operand.vmem [shape: f32[1,64], index: 7, kind: input, shape index: {}]
  %s8 = inlined_call_operand.<no memory space> [shape: f32[1,1], index: 8, kind: input, shape index: {}]
  %s9 = inlined_call_operand.vmem [shape: f32[16,1], index: 9, kind: output, shape index: {}]
  %s10 = sld [smem:[#allocation0]]
  $region50: #{tpu_custom_call.1} parent=0
    _
  %s12 = ssub.s32 1, %s10
  %s13 = scalar_select 0, %s12, %s10
  %v14 = vstv %s8
  %15 = vst [vmem:[#allocation2] sm:$0x1] %v14
  $region1: #{tpu_custom_call.1} parent=0
    #allocation3 [shape = 'u8[196608]{0}', space=vmem, size = 0x30000, scoped, tag = 'input window, operand 1, single buffered']
    #allocation4 [shape = 's32[1]{0}', space=sflag, size = 0x4, scoped, tag = 'scoped memory for tpu_custom_call.1']
    %16 = vsyncpa [#allocation4], 0
    // Predicated region
    $region2: #{tpu_custom_call.1} parent=1 // pred_check
      _
    $region3: #{tpu_custom_call.1} parent=1 // pred_check_branch
      %18 = sbr.rel (0) target = $region5
    $region4: #{tpu_custom_call.1} parent=1 // pred_region
      _
    $region5: #{tpu_custom_call.1} parent=1 // pred_fallthru
      _
    // Predicated region
    $region6: #{tpu_custom_call.1} parent=1 // pred_check
      _
    $region7: #{tpu_custom_call.1} parent=1 // pred_check_branch
      %20 = sbr.rel (0) target = $region9
    $region8: #{tpu_custom_call.1} parent=1 // pred_region
      %s22 = ssub.s32 6144, 6144
      %23 = vsyncadd [#allocation4], %s22
      %s24 = sshll.u32 [#allocation3], 4
      %s25 = int_to_ptr.vmem [resolvable:$true] %s24
      %30 = dma.hbm_to_vmem [thread:$0]  %s1, 6144, %s25, [#allocation4], 128, 128, 8
    $region9: #{tpu_custom_call.1} parent=1 // pred_fallthru
      _
    // Predicated region
    $region10: #{tpu_custom_call.1} parent=1 // pred_check
      _
    $region11: #{tpu_custom_call.1} parent=1 // pred_check_branch
      %32 = sbr.rel (0) target = $region13
    $region12: #{tpu_custom_call.1} parent=1 // pred_region
      _
    $region13: #{tpu_custom_call.1} parent=1 // pred_fallthru
      _
    // Predicated region
    $region14: #{tpu_custom_call.1} parent=1 // pred_check
      _
    $region15: #{tpu_custom_call.1} parent=1 // pred_check_branch
      %34 = sbr.rel (0) target = $region17
    $region16: #{tpu_custom_call.1} parent=1 // pred_region
      _
    $region17: #{tpu_custom_call.1} parent=1 // pred_fallthru
      _
    // Predicated region
    $region18: #{tpu_custom_call.1} parent=1 // pred_check
      _
    $region19: #{tpu_custom_call.1} parent=1 // pred_check_branch
      %36 = sbr.rel (0) target = $region21
    $region20: #{tpu_custom_call.1} parent=1 // pred_region
      _
    $region21: #{tpu_custom_call.1} parent=1 // pred_fallthru
      _
    // Predicated region
    $region22: #{tpu_custom_call.1} parent=1 // pred_check
      _
    $region23: #{tpu_custom_call.1} parent=1 // pred_check_branch
      %38 = sbr.rel (0) target = $region25
    $region24: #{tpu_custom_call.1} parent=1 // pred_region
      _
    $region25: #{tpu_custom_call.1} parent=1 // pred_fallthru
      _
    // Predicated region
    $region26: #{tpu_custom_call.1} parent=1 // pred_check
      _
    $region27: #{tpu_custom_call.1} parent=1 // pred_check_branch
      %40 = sbr.rel (0) target = $region29
    $region28: #{tpu_custom_call.1} parent=1 // pred_region
      _
    $region29: #{tpu_custom_call.1} parent=1 // pred_fallthru
      _
    // Predicated region
    $region30: #{tpu_custom_call.1} parent=1 // pred_check
      _
    $region31: #{tpu_custom_call.1} parent=1 // pred_check_branch
      %42 = sbr.rel (0) target = $region33
    $region32: #{tpu_custom_call.1} parent=1 // pred_region
      _
    $region33: #{tpu_custom_call.1} parent=1 // pred_fallthru
      _
    // Predicated region
    $region34: #{tpu_custom_call.1} parent=1 // pred_check
      _
    $region35: #{tpu_custom_call.1} parent=1 // pred_check_branch
      %44 = sbr.rel (0) target = $region37
    $region36: #{tpu_custom_call.1} parent=1 // pred_region
      _
    $region37: #{tpu_custom_call.1} parent=1 // pred_fallthru
      _
    // Predicated region
    $region38: #{tpu_custom_call.1} parent=1 // pred_check
      _
    $region39: #{tpu_custom_call.1} parent=1 // pred_check_branch
      %46 = sbr.rel (0) target = $region41
    $region40: #{tpu_custom_call.1} parent=1 // pred_region
      %47 = dma.done [#allocation4], 6144
    $region41: #{tpu_custom_call.1} parent=1 // pred_fallthru
      _
    %v48 = vld [vmem:[%s0] sm:$0xff]
    %v49 = vld [vmem:[%s0 + $0x8] sm:$0xff]
    %v50 = vld [vmem:[%s0 + $0x10] sm:$0xff]
    %v51 = vld [vmem:[%s0 + $0x18] sm:$0xff]
    %v52 = vld [vmem:[%s0 + $0x20] sm:$0xff]
    %v53 = vld [vmem:[%s0 + $0x28] sm:$0xff]
    %v54 = vld [vmem:[#allocation3] sm:$0xff]
    %v55 = vld [vmem:[#allocation3 + $0x8] sm:$0xff]
    %v56 = vld [vmem:[#allocation3 + $0x10] sm:$0xff]
    %v57 = vld [vmem:[#allocation3 + $0x18] sm:$0xff]
    %v58 = vld [vmem:[#allocation3 + $0x20] sm:$0xff]
    %v59 = vld [vmem:[#allocation3 + $0x28] sm:$0xff]
    %v60 = vld [vmem:[#allocation3 + $0x30] sm:$0xff]
    %v61 = vld [vmem:[#allocation3 + $0x38] sm:$0xff]
    %v62 = vld [vmem:[#allocation3 + $0x40] sm:$0xff]
    %v63 = vld [vmem:[#allocation3 + $0x48] sm:$0xff]
    %v64 = vld [vmem:[#allocation3 + $0x50] sm:$0xff]
    %v65 = vld [vmem:[#allocation3 + $0x58] sm:$0xff]
    %v66 = vld [vmem:[#allocation3 + $0x60] sm:$0xff]
    %v67 = vld [vmem:[#allocation3 + $0x68] sm:$0xff]
    %v68 = vld [vmem:[#allocation3 + $0x70] sm:$0xff]
    %v69 = vld [vmem:[#allocation3 + $0x78] sm:$0xff]
    %v70 = vld [vmem:[#allocation3 + $0x80] sm:$0xff]
    %v71 = vld [vmem:[#allocation3 + $0x88] sm:$0xff]
    %v72 = vld [vmem:[#allocation3 + $0x90] sm:$0xff]
    %v73 = vld [vmem:[#allocation3 + $0x98] sm:$0xff]
    %v74 = vld [vmem:[#allocation3 + $0xa0] sm:$0xff]
    %v75 = vld [vmem:[#allocation3 + $0xa8] sm:$0xff]
    %v76 = vld [vmem:[#allocation3 + $0xb0] sm:$0xff]
    %v77 = vld [vmem:[#allocation3 + $0xb8] sm:$0xff]
    %v78 = vld [vmem:[#allocation3 + $0xc0] sm:$0xff]
    %v79 = vld [vmem:[#allocation3 + $0xc8] sm:$0xff]
    %v80 = vld [vmem:[#allocation3 + $0xd0] sm:$0xff]
    %v81 = vld [vmem:[#allocation3 + $0xd8] sm:$0xff]
    %v82 = vld [vmem:[#allocation3 + $0xe0] sm:$0xff]
    %v83 = vld [vmem:[#allocation3 + $0xe8] sm:$0xff]
    %v84 = vld [vmem:[#allocation3 + $0xf0] sm:$0xff]
    %v85 = vld [vmem:[#allocation3 + $0xf8] sm:$0xff]
    %v86 = vld [vmem:[#allocation3 + $0x100] sm:$0xff]
    %v87 = vld [vmem:[#allocation3 + $0x108] sm:$0xff]
    %v88 = vld [vmem:[#allocation3 + $0x110] sm:$0xff]
    %v89 = vld [vmem:[#allocation3 + $0x118] sm:$0xff]
    %v90 = vld [vmem:[#allocation3 + $0x120] sm:$0xff]
    %v91 = vld [vmem:[#allocation3 + $0x128] sm:$0xff]
    %v92 = vld [vmem:[#allocation3 + $0x130] sm:$0xff]
    %v93 = vld [vmem:[#allocation3 + $0x138] sm:$0xff]
    %v94 = vld [vmem:[#allocation3 + $0x140] sm:$0xff]
    %v95 = vld [vmem:[#allocation3 + $0x148] sm:$0xff]
    %v96 = vld [vmem:[#allocation3 + $0x150] sm:$0xff]
    %v97 = vld [vmem:[#allocation3 + $0x158] sm:$0xff]
    %v98 = vld [vmem:[#allocation3 + $0x160] sm:$0xff]
    %v99 = vld [vmem:[#allocation3 + $0x168] sm:$0xff]
    %v100 = vld [vmem:[#allocation3 + $0x170] sm:$0xff]
    %v101 = vld [vmem:[#allocation3 + $0x178] sm:$0xff]
    %v102 = vld [vmem:[%s2] sm:$0x1]
    %v104 = vlaneseq
    %v105 = vshrl.u32 %v104, 7
    %v106 = vsub.s32 0, %v105
    %v107 = vrot.slane %v102, %v106
    %109 = vmatprep.subr.mxu0 0.0
    %110 = vmatpush1.msra.mxu0 %v54
    %111 = vmatprep.subr.mxu0 0.0
    %112 = vmatpush1.msra.mxu0 %v55
    %113 = vmatprep.subr.mxu0 0.0
    %114 = vmatpush1.msra.mxu0 %v56
    %115 = vmatprep.subr.mxu0 0.0
    %116 = vmatpush1.msra.mxu0 %v57
    %117 = vmatprep.subr.mxu0 0.0
    %118 = vmatpush1.msra.mxu0 %v58
    %119 = vmatprep.subr.mxu0 0.0
    %120 = vmatpush1.msra.mxu0 %v59
    %121 = vmatprep.subr.mxu0 0.0
    %122 = vmatpush1.msra.mxu0 %v60
    %123 = vmatprep.subr.mxu0 0.0
    %124 = vmatpush1.msra.mxu0 %v61
    %125 = vmatprep.subr.mxu0 0.0
    %126 = vmatpush1.msra.mxu0 %v62
    %127 = vmatprep.subr.mxu0 0.0
    %128 = vmatpush1.msra.mxu0 %v63
    %129 = vmatprep.subr.mxu0 0.0
    %130 = vmatpush1.msra.mxu0 %v64
    %131 = vmatprep.subr.mxu0 0.0
    %132 = vmatpush1.msra.mxu0 %v65
    %133 = vmatprep.subr.mxu0 0.0
    %134 = vmatpush1.msra.mxu0 %v66
    %135 = vmatprep.subr.mxu0 0.0
    %136 = vmatpush1.msra.mxu0 %v67
    %137 = vmatprep.subr.mxu0 0.0
    %138 = vmatpush1.msra.mxu0 %v68
    %139 = vmatprep.subr.mxu0 0.0
    %140 = vmatpush1.msra.mxu0 %v69
    %141 = vmatprep.subr.mxu0 0.0
    %142 = vmatpush1.msra.mxu0 %v70
    %143 = vmatprep.subr.mxu0 0.0
    %144 = vmatpush1.msra.mxu0 %v71
    %145 = vmatprep.subr.mxu0 0.0
    %146 = vmatpush1.msra.mxu0 %v72
    %147 = vmatprep.subr.mxu0 0.0
    %148 = vmatpush1.msra.mxu0 %v73
    %149 = vmatprep.subr.mxu0 0.0
    %150 = vmatpush1.msra.mxu0 %v74
    %151 = vmatprep.subr.mxu0 0.0
    %152 = vmatpush1.msra.mxu0 %v75
    %153 = vmatprep.subr.mxu0 0.0
    %154 = vmatpush1.msra.mxu0 %v76
    %155 = vmatprep.subr.mxu0 0.0
    %156 = vmatpush1.msra.mxu0 %v77
    %157 = vmatprep.subr.mxu0 0.0
    %158 = vmatpush1.msra.mxu0 %v78
    %159 = vmatprep.subr.mxu0 0.0
    %160 = vmatpush1.msra.mxu0 %v79
    %161 = vmatprep.subr.mxu0 0.0
    %162 = vmatpush1.msra.mxu0 %v80
    %163 = vmatprep.subr.mxu0 0.0
    %164 = vmatpush1.msra.mxu0 %v81
    %165 = vmatprep.subr.mxu0 0.0
    %166 = vmatpush1.msra.mxu0 %v82
    %167 = vmatprep.subr.mxu0 0.0
    %168 = vmatpush1.msra.mxu0 %v83
    %169 = vmatprep.subr.mxu0 0.0
    %170 = vmatpush1.msra.mxu0 %v84
    %171 = vmatprep.subr.mxu0 0.0
    %172 = vmatpush1.msra.mxu0 %v85
    %173 = vmatprep.mubr.f32.mxu0 %v49
    %174 = vmatmul.mubr.f32.gmra.mrb[0].mxu0 %v48
    %v175 = vpop.f32.mrb[0].mxu0
    %v176 = vadd.f32 %v107, %v175
    %v177 = vpop.f32.mrb[0].mxu0
    %178 = vmatprep.mubr.f32.mxu0 %v52
    %179 = vmatmul.mubr.f32.gmra.mrb[0].mxu0 %v51
    %v180 = vpop.f32.mrb[0].mxu0
    %v181 = vadd.f32 %v107, %v180
    %v182 = vpop.f32.mrb[0].mxu0
    %183 = vdwg.mxu0
    %184 = vmatprep.subr.mxu0 0.0
    %185 = vmatpush1.msra.mxu0 %v86
    %186 = vmatprep.subr.mxu0 0.0
    %187 = vmatpush1.msra.mxu0 %v87
    %188 = vmatprep.subr.mxu0 0.0
    %189 = vmatpush1.msra.mxu0 %v88
    %190 = vmatprep.subr.mxu0 0.0
    %191 = vmatpush1.msra.mxu0 %v89
    %192 = vmatprep.subr.mxu0 0.0
    %193 = vmatpush1.msra.mxu0 %v90
    %194 = vmatprep.subr.mxu0 0.0
    %195 = vmatpush1.msra.mxu0 %v91
    %196 = vmatprep.subr.mxu0 0.0
    %197 = vmatpush1.msra.mxu0 %v92
    %198 = vmatprep.subr.mxu0 0.0
    %199 = vmatpush1.msra.mxu0 %v93
    %200 = vmatprep.subr.mxu0 0.0
    %201 = vmatpush1.msra.mxu0 %v94
    %202 = vmatprep.subr.mxu0 0.0
    %203 = vmatpush1.msra.mxu0 %v95
    %204 = vmatprep.subr.mxu0 0.0
    %205 = vmatpush1.msra.mxu0 %v96
    %206 = vmatprep.subr.mxu0 0.0
    %207 = vmatpush1.msra.mxu0 %v97
    %208 = vmatprep.subr.mxu0 0.0
    %209 = vmatpush1.msra.mxu0 %v98
    %210 = vmatprep.subr.mxu0 0.0
    %211 = vmatpush1.msra.mxu0 %v99
    %212 = vmatprep.subr.mxu0 0.0
    %213 = vmatpush1.msra.mxu0 %v100
    %214 = vmatprep.subr.mxu0 0.0
    %215 = vmatpush1.msra.mxu0 %v101
    %216 = vmatprep.subr.mxu0 0.0
    %217 = vmatpush1.msra.mxu0 0.0
    %218 = vmatprep.subr.mxu0 0.0
    %219 = vmatpush1.msra.mxu0 0.0
    %220 = vmatprep.subr.mxu0 0.0
    %221 = vmatpush1.msra.mxu0 0.0
    %222 = vmatprep.subr.mxu0 0.0
    %223 = vmatpush1.msra.mxu0 0.0
    %224 = vmatprep.subr.mxu0 0.0
    %225 = vmatpush1.msra.mxu0 0.0
    %226 = vmatprep.subr.mxu0 0.0
    %227 = vmatpush1.msra.mxu0 0.0
    %228 = vmatprep.subr.mxu0 0.0
    %229 = vmatpush1.msra.mxu0 0.0
    %230 = vmatprep.subr.mxu0 0.0
    %231 = vmatpush1.msra.mxu0 0.0
    %232 = vmatprep.subr.mxu0 0.0
    %233 = vmatpush1.msra.mxu0 0.0
    %234 = vmatprep.subr.mxu0 0.0
    %235 = vmatpush1.msra.mxu0 0.0
    %236 = vmatprep.subr.mxu0 0.0
    %237 = vmatpush1.msra.mxu0 0.0
    %238 = vmatprep.subr.mxu0 0.0
    %239 = vmatpush1.msra.mxu0 0.0
    %240 = vmatprep.subr.mxu0 0.0
    %241 = vmatpush1.msra.mxu0 0.0
    %242 = vmatprep.subr.mxu0 0.0
    %243 = vmatpush1.msra.mxu0 0.0
    %244 = vmatprep.subr.mxu0 0.0
    %245 = vmatpush1.msra.mxu0 0.0
    %246 = vmatprep.subr.mxu0 0.0
    %247 = vmatpush1.msra.mxu0 0.0
    %248 = vmatprep.mubr.f32.mxu0 0.0
    %249 = vmatmul.mubr.f32.gmra.mrb[0].mxu0 %v50
    %v250 = vpop.f32.mrb[0].mxu0
    %v251 = vadd.f32 %v176, %v250
    %v252 = vpop.f32.mrb[0].mxu0
    %253 = vmatprep.mubr.f32.mxu0 0.0
    %254 = vmatmul.mubr.f32.gmra.mrb[0].mxu0 %v53
    %v255 = vpop.f32.mrb[0].mxu0
    %v256 = vadd.f32 %v181, %v255
    %v257 = vpop.f32.mrb[0].mxu0
    %258 = vdwg.mxu0
    %vm259 = vcmp.gt.f32.partialorder %v251, 0.0
    %vm260 = vcmp.gt.f32.partialorder %v256, 0.0
    %v261 = vmul.f32 %v251, 10.0
    %v262 = vmul.f32 %v256, 10.0
    %v263 = vmul.f32 %v261, 1.442695
    %v264 = vpow.pop %v263
    %v265 = vmul.f32 %v262, 1.442695
    %v266 = vpow.pop %v265
    %v267 = vsub.f32 %v264, 1.0
    %v268 = vsub.f32 %v266, 1.0
    %v269 = vmul.f32 %v267, 0.1
    %v270 = vmul.f32 %v268, 0.1
    %v271 = vsel %vm259, %v251, %v269
    %v272 = vsel %vm260, %v256, %v270
    %v273 = vld [vmem:[%s3] sm:$0xff]
    %v274 = vld [vmem:[%s3 + $0x8] sm:$0xff]
    %v275 = vld [vmem:[%s3 + $0x10] sm:$0xff]
    %v276 = vld [vmem:[%s3 + $0x18] sm:$0xff]
    %v277 = vld [vmem:[%s3 + $0x20] sm:$0xff]
    %v278 = vld [vmem:[%s3 + $0x28] sm:$0xff]
    %v279 = vld [vmem:[%s3 + $0x30] sm:$0xff]
    %v280 = vld [vmem:[%s3 + $0x38] sm:$0xff]
    %v281 = vld [vmem:[%s3 + $0x40] sm:$0xff]
    %v282 = vld [vmem:[%s3 + $0x48] sm:$0xff]
    %v283 = vld [vmem:[%s3 + $0x50] sm:$0xff]
    %v284 = vld [vmem:[%s3 + $0x58] sm:$0xff]
    %v285 = vld [vmem:[%s3 + $0x60] sm:$0xff]
    %v286 = vld [vmem:[%s3 + $0x68] sm:$0xff]
    %v287 = vld [vmem:[%s3 + $0x70] sm:$0xff]
    %v288 = vld [vmem:[%s3 + $0x78] sm:$0xff]
    %v289 = vld [vmem:[%s4] sm:$0x1]
    %v291 = vlaneseq
    %v292 = vshrl.u32 %v291, 7
    %v293 = vsub.s32 0, %v292
    %v294 = vrot.slane %v289, %v293
    %296 = vmatprep.subr.mxu0 0.0
    %297 = vmatpush1.msra.mxu0 %v273
    %298 = vmatprep.subr.mxu0 0.0
    %299 = vmatpush1.msra.mxu0 %v274
    %300 = vmatprep.subr.mxu0 0.0
    %301 = vmatpush1.msra.mxu0 %v275
    %302 = vmatprep.subr.mxu0 0.0
    %303 = vmatpush1.msra.mxu0 %v276
    %304 = vmatprep.subr.mxu0 0.0
    %305 = vmatpush1.msra.mxu0 %v277
    %306 = vmatprep.subr.mxu0 0.0
    %307 = vmatpush1.msra.mxu0 %v278
    %308 = vmatprep.subr.mxu0 0.0
    %309 = vmatpush1.msra.mxu0 %v279
    %310 = vmatprep.subr.mxu0 0.0
    %311 = vmatpush1.msra.mxu0 %v280
    %312 = vmatprep.subr.mxu0 0.0
    %313 = vmatpush1.msra.mxu0 %v281
    %314 = vmatprep.subr.mxu0 0.0
    %315 = vmatpush1.msra.mxu0 %v282
    %316 = vmatprep.subr.mxu0 0.0
    %317 = vmatpush1.msra.mxu0 %v283
    %318 = vmatprep.subr.mxu0 0.0
    %319 = vmatpush1.msra.mxu0 %v284
    %320 = vmatprep.subr.mxu0 0.0
    %321 = vmatpush1.msra.mxu0 %v285
    %322 = vmatprep.subr.mxu0 0.0
    %323 = vmatpush1.msra.mxu0 %v286
    %324 = vmatprep.subr.mxu0 0.0
    %325 = vmatpush1.msra.mxu0 %v287
    %326 = vmatprep.subr.mxu0 0.0
    %327 = vmatpush1.msra.mxu0 %v288
    %328 = vmatprep.subr.mxu0 0.0
    %329 = vmatpush1.msra.mxu0 0.0
    %330 = vmatprep.subr.mxu0 0.0
    %331 = vmatpush1.msra.mxu0 0.0
    %332 = vmatprep.subr.mxu0 0.0
    %333 = vmatpush1.msra.mxu0 0.0
    %334 = vmatprep.subr.mxu0 0.0
    %335 = vmatpush1.msra.mxu0 0.0
    %336 = vmatprep.subr.mxu0 0.0
    %337 = vmatpush1.msra.mxu0 0.0
    %338 = vmatprep.subr.mxu0 0.0
    %339 = vmatpush1.msra.mxu0 0.0
    %340 = vmatprep.subr.mxu0 0.0
    %341 = vmatpush1.msra.mxu0 0.0
    %342 = vmatprep.subr.mxu0 0.0
    %343 = vmatpush1.msra.mxu0 0.0
    %344 = vmatprep.subr.mxu0 0.0
    %345 = vmatpush1.msra.mxu0 0.0
    %346 = vmatprep.subr.mxu0 0.0
    %347 = vmatpush1.msra.mxu0 0.0
    %348 = vmatprep.subr.mxu0 0.0
    %349 = vmatpush1.msra.mxu0 0.0
    %350 = vmatprep.subr.mxu0 0.0
    %351 = vmatpush1.msra.mxu0 0.0
    %352 = vmatprep.subr.mxu0 0.0
    %353 = vmatpush1.msra.mxu0 0.0
    %354 = vmatprep.subr.mxu0 0.0
    %355 = vmatpush1.msra.mxu0 0.0
    %356 = vmatprep.subr.mxu0 0.0
    %357 = vmatpush1.msra.mxu0 0.0
    %358 = vmatprep.subr.mxu0 0.0
    %359 = vmatpush1.msra.mxu0 0.0
    %360 = vmatprep.mubr.f32.mxu0 0.0
    %361 = vmatmul.mubr.f32.gmra.mrb[0].mxu0 %v271
    %v362 = vpop.f32.mrb[0].mxu0
    %v363 = vadd.f32 %v294, %v362
    %v364 = vpop.f32.mrb[0].mxu0
    %365 = vmatprep.mubr.f32.mxu0 0.0
    %366 = vmatmul.mubr.f32.gmra.mrb[0].mxu0 %v272
    %v367 = vpop.f32.mrb[0].mxu0
    %v368 = vadd.f32 %v294, %v367
    %v369 = vpop.f32.mrb[0].mxu0
    %370 = vdwg.mxu0
    %vm371 = vcmp.gt.f32.partialorder %v363, 0.0
    %vm372 = vcmp.gt.f32.partialorder %v368, 0.0
    %v373 = vmul.f32 %v363, 10.0
    %v374 = vmul.f32 %v368, 10.0
    %v375 = vmul.f32 %v373, 1.442695
    %v376 = vpow.pop %v375
    %v377 = vmul.f32 %v374, 1.442695
    %v378 = vpow.pop %v377
    %v379 = vsub.f32 %v376, 1.0
    %v380 = vsub.f32 %v378, 1.0
    %v381 = vmul.f32 %v379, 0.1
    %v382 = vmul.f32 %v380, 0.1
    %v383 = vsel %vm371, %v363, %v381
    %v384 = vsel %vm372, %v368, %v382
    %v385 = vld [vmem:[%s5] sm:$0xff]
    %v386 = vld [vmem:[%s5 + $0x8] sm:$0xff]
    %v387 = vld [vmem:[%s5 + $0x10] sm:$0xff]
    %v388 = vld [vmem:[%s5 + $0x18] sm:$0xff]
    %v389 = vld [vmem:[%s5 + $0x20] sm:$0xff]
    %v390 = vld [vmem:[%s5 + $0x28] sm:$0xff]
    %v391 = vld [vmem:[%s5 + $0x30] sm:$0xff]
    %v392 = vld [vmem:[%s5 + $0x38] sm:$0xff]
    %v393 = vld [vmem:[%s5 + $0x40] sm:$0xff]
    %v394 = vld [vmem:[%s5 + $0x48] sm:$0xff]
    %v395 = vld [vmem:[%s5 + $0x50] sm:$0xff]
    %v396 = vld [vmem:[%s5 + $0x58] sm:$0xff]
    %v397 = vld [vmem:[%s5 + $0x60] sm:$0xff]
    %v398 = vld [vmem:[%s5 + $0x68] sm:$0xff]
    %v399 = vld [vmem:[%s5 + $0x70] sm:$0xff]
    %v400 = vld [vmem:[%s5 + $0x78] sm:$0xff]
    %v401 = vld [vmem:[%s6] sm:$0x1]
    %v403 = vlaneseq
    %v404 = vshrl.u32 %v403, 7
    %v405 = vsub.s32 0, %v404
    %v406 = vrot.slane %v401, %v405
    %408 = vmatprep.subr.mxu0 0.0
    %409 = vmatpush1.msra.mxu0 %v385
    %410 = vmatprep.subr.mxu0 0.0
    %411 = vmatpush1.msra.mxu0 %v386
    %412 = vmatprep.subr.mxu0 0.0
    %413 = vmatpush1.msra.mxu0 %v387
    %414 = vmatprep.subr.mxu0 0.0
    %415 = vmatpush1.msra.mxu0 %v388
    %416 = vmatprep.subr.mxu0 0.0
    %417 = vmatpush1.msra.mxu0 %v389
    %418 = vmatprep.subr.mxu0 0.0
    %419 = vmatpush1.msra.mxu0 %v390
    %420 = vmatprep.subr.mxu0 0.0
    %421 = vmatpush1.msra.mxu0 %v391
    %422 = vmatprep.subr.mxu0 0.0
    %423 = vmatpush1.msra.mxu0 %v392
    %424 = vmatprep.subr.mxu0 0.0
    %425 = vmatpush1.msra.mxu0 %v393
    %426 = vmatprep.subr.mxu0 0.0
    %427 = vmatpush1.msra.mxu0 %v394
    %428 = vmatprep.subr.mxu0 0.0
    %429 = vmatpush1.msra.mxu0 %v395
    %430 = vmatprep.subr.mxu0 0.0
    %431 = vmatpush1.msra.mxu0 %v396
    %432 = vmatprep.subr.mxu0 0.0
    %433 = vmatpush1.msra.mxu0 %v397
    %434 = vmatprep.subr.mxu0 0.0
    %435 = vmatpush1.msra.mxu0 %v398
    %436 = vmatprep.subr.mxu0 0.0
    %437 = vmatpush1.msra.mxu0 %v399
    %438 = vmatprep.subr.mxu0 0.0
    %439 = vmatpush1.msra.mxu0 %v400
    %440 = vmatprep.subr.mxu0 0.0
    %441 = vmatpush1.msra.mxu0 0.0
    %442 = vmatprep.subr.mxu0 0.0
    %443 = vmatpush1.msra.mxu0 0.0
    %444 = vmatprep.subr.mxu0 0.0
    %445 = vmatpush1.msra.mxu0 0.0
    %446 = vmatprep.subr.mxu0 0.0
    %447 = vmatpush1.msra.mxu0 0.0
    %448 = vmatprep.subr.mxu0 0.0
    %449 = vmatpush1.msra.mxu0 0.0
    %450 = vmatprep.subr.mxu0 0.0
    %451 = vmatpush1.msra.mxu0 0.0
    %452 = vmatprep.subr.mxu0 0.0
    %453 = vmatpush1.msra.mxu0 0.0
    %454 = vmatprep.subr.mxu0 0.0
    %455 = vmatpush1.msra.mxu0 0.0
    %456 = vmatprep.subr.mxu0 0.0
    %457 = vmatpush1.msra.mxu0 0.0
    %458 = vmatprep.subr.mxu0 0.0
    %459 = vmatpush1.msra.mxu0 0.0
    %460 = vmatprep.subr.mxu0 0.0
    %461 = vmatpush1.msra.mxu0 0.0
    %462 = vmatprep.subr.mxu0 0.0
    %463 = vmatpush1.msra.mxu0 0.0
    %464 = vmatprep.subr.mxu0 0.0
    %465 = vmatpush1.msra.mxu0 0.0
    %466 = vmatprep.subr.mxu0 0.0
    %467 = vmatpush1.msra.mxu0 0.0
    %468 = vmatprep.subr.mxu0 0.0
    %469 = vmatpush1.msra.mxu0 0.0
    %470 = vmatprep.subr.mxu0 0.0
    %471 = vmatpush1.msra.mxu0 0.0
    %472 = vmatprep.mubr.f32.mxu0 0.0
    %473 = vmatmul.mubr.f32.gmra.mrb[0].mxu0 %v383
    %v474 = vpop.f32.mrb[0].mxu0
    %v475 = vadd.f32 %v406, %v474
    %v476 = vpop.f32.mrb[0].mxu0
    %477 = vmatprep.mubr.f32.mxu0 0.0
    %478 = vmatmul.mubr.f32.gmra.mrb[0].mxu0 %v384
    %v479 = vpop.f32.mrb[0].mxu0
    %v480 = vadd.f32 %v406, %v479
    %v481 = vpop.f32.mrb[0].mxu0
    %482 = vdwg.mxu0
    %vm483 = vcmp.gt.f32.partialorder %v475, 0.0
    %vm484 = vcmp.gt.f32.partialorder %v480, 0.0
    %v485 = vmul.f32 %v475, 10.0
    %v486 = vmul.f32 %v480, 10.0
    %v487 = vmul.f32 %v485, 1.442695
    %v488 = vpow.pop %v487
    %v489 = vmul.f32 %v486, 1.442695
    %v490 = vpow.pop %v489
    %v491 = vsub.f32 %v488, 1.0
    %v492 = vsub.f32 %v490, 1.0
    %v493 = vmul.f32 %v491, 0.1
    %v494 = vmul.f32 %v492, 0.1
    %v495 = vsel %vm483, %v475, %v493
    %v496 = vsel %vm484, %v480, %v494
    %v497 = vld [vmem:[%s7] sm:$0x1]
    %v499 = vlaneseq
    %v500 = vshrl.u32 %v499, 7
    %v501 = vsub.s32 0, %v500
    %v502 = vrot.slane %v497, %v501
    %v504 = vmul.f32 %v495, %v502
    %v505 = vmul.f32 %v496, %v502
    %vm506 = vcmask 523264
    %v507 = vsel %vm506, %v504, 0.0
    %508 = vadd.xlane.f32.xlu0 %v507
    %v509 = vpop.xlane.xlu0 %508
    %v510 = vsel %vm506, %v505, 0.0
    %511 = vadd.xlane.f32.xlu0 %v510
    %v512 = vpop.xlane.xlu0 %511
    %v513 = vld [vmem:[#allocation2] sm:$0x1]
    %v515 = vlaneseq
    %v516 = vshrl.u32 %v515, 7
    %v517 = vsub.s32 0, %v516
    %v518 = vrot.slane %v513, %v517
    %v520 = vadd.f32 %v509, %v518
    %v521 = vadd.f32 %v512, %v518
    %vm522 = vcmask 7168
    %523 = vst.msk [vmem:[%s9] sm:$0xff] %vm522, %v520
    %524 = vst.msk [vmem:[%s9 + $0x8] sm:$0xff] %vm522, %v521
    // Predicated region
    $region42: #{tpu_custom_call.1} parent=1 // pred_check
      _
    $region43: #{tpu_custom_call.1} parent=1 // pred_check_branch
      %526 = sbr.rel (0) target = $region45
    $region44: #{tpu_custom_call.1} parent=1 // pred_region
      _
    $region45: #{tpu_custom_call.1} parent=1 // pred_fallthru
      _
    // Predicated region
    $region46: #{tpu_custom_call.1} parent=1 // pred_check
      _
    $region47: #{tpu_custom_call.1} parent=1 // pred_check_branch
      %528 = sbr.rel (0) target = $region49
    $region48: #{tpu_custom_call.1} parent=1 // pred_region
      _
    $region49: #{tpu_custom_call.1} parent=1 // pred_fallthru
      _
    %529 = vsyncpa [#allocation4], 1

</llo_original>
